<compile_context>
chip_gen: v6e
topology: v6e:2x2x1
jax: 0.10.0
libtpu: 0.0.40
codegen_flags: <defaults>
</compile_context>

<pallas_src>
import jax
import jax.numpy as jnp
from jax import lax
from jax.experimental import pallas as pl
from jax.experimental.pallas import tpu as pltpu

EPS = 1e-5
# Explicit VMEM budget (feedback: do not rely on the scoped default; fits
# v7x's 64 MiB physical VMEM with headroom, trivially fits v5e/v6e).
_VMEM_LIMIT = 48 * 1024 * 1024


def _round_up(x, m):
    return ((x + m - 1) // m) * m


def _largest_divisor_leq(n, cap):
    for r in range(min(cap, n), 0, -1):
        if n % r == 0:
            return r
    return 1


# ----------------------------------------------------------------------------
# Kernel 1: fused 1x1 conv (= matmul, BN pre-folded) + optional residual + ReLU
# ----------------------------------------------------------------------------
def _make_pointwise_kernel(apply_relu: bool, has_residual: bool):
    def kernel(*refs):
        if has_residual:
            x_ref, w_ref, b_ref, r_ref, o_ref = refs
        else:
            x_ref, w_ref, b_ref, o_ref = refs
        acc = jnp.dot(x_ref[...], w_ref[...], preferred_element_type=jnp.float32)
        y = acc + b_ref[...]
        if has_residual:
            y = y + r_ref[...].astype(jnp.float32)
        if apply_relu:
            y = jnp.maximum(y, 0.0)
        o_ref[...] = y.astype(o_ref.dtype)

    return kernel


def pointwise_conv_bias(x2d, w_mat, bias, *, relu, residual=None,
                        out_dtype=jnp.float32, row_tile=512):
    """1x1 conv as a matmul with BN already folded into (w_mat, bias).

    x2d: (M, Cin) bf16; w_mat: (Cin, Cout) bf16; bias: (Cout,) f32;
    residual: optional (M, Cout) f32 added before the final ReLU.
    """
    M, Cin = x2d.shape
    Cout = w_mat.shape[1]

    # Large row tile (512) for HBM-roofline efficiency; pad M instead of the
    # old tm=8 / tm=M fallbacks.
    tm = min(row_tile, _round_up(M, 8))
    Mp = _round_up(M, tm)
    if Mp != M:
        x2d = jnp.pad(x2d, ((0, Mp - M), (0, 0)))
        if residual is not None:
            residual = jnp.pad(residual, ((0, Mp - M), (0, 0)))

    in_specs = [
        pl.BlockSpec((tm, Cin), lambda i: (i, 0)),
        pl.BlockSpec((Cin, Cout), lambda i: (0, 0)),
        pl.BlockSpec((1, Cout), lambda i: (0, 0)),
    ]
    args = [x2d, w_mat, bias.reshape(1, Cout)]
    if residual is not None:
        in_specs.append(pl.BlockSpec((tm, Cout), lambda i: (i, 0)))
        args.append(residual)

    out = pl.pallas_call(
        _make_pointwise_kernel(relu, residual is not None),
        out_shape=jax.ShapeDtypeStruct((Mp, Cout), out_dtype),
        grid_spec=pltpu.PrefetchScalarGridSpec(
            num_scalar_prefetch=0,
            grid=(Mp // tm,),
            in_specs=in_specs,
            out_specs=pl.BlockSpec((tm, Cout), lambda i: (i, 0)),
        ),
        compiler_params=pltpu.CompilerParams(
            dimension_semantics=("parallel",),
            vmem_limit_bytes=_VMEM_LIMIT),
    )(*args)
    return out[:M] if Mp != M else out


# ----------------------------------------------------------------------------
# Kernel 2: grouped 3x3 conv (BN pre-folded) + ReLU, lane-dense channels-last.
#
# The padded activation is passed n_taps = (R-1)*stride + 3 times with
# single-row BlockSpecs: operand j holds padded input row m*R*stride + j, so
# the halo never has to be materialised (no im2col, no extra HBM writes).
# Output row i of the tile uses operands i*stride + {0,1,2}.  Channel mixing
# uses a block-diagonal (3,3,C,C) weight so the matmul output is the full,
# lane-dense channel axis and the result is written directly as (N,Ho,Wo,C).
# ----------------------------------------------------------------------------
def _make_conv3x3_kernel(rows_per_step: int, stride: int):
    n_taps = (rows_per_step - 1) * stride + 3

    def kernel(*refs):
        taps = refs[:n_taps]                      # each (1, 1, Wp, C) bf16
        w_ref, b_ref, o_ref = refs[n_taps:]       # (3,3,C,C), (1,C), (1,R,Wo,C)
        wo = o_ref.shape[2]
        bias = b_ref[...]                         # (1, C) f32

        for i in range(rows_per_step):            # static unroll
            acc = None
            for kh in range(3):
                row = taps[i * stride + kh]
                for kw in range(3):
                    if stride == 1:
                        lhs = row[0, 0, pl.ds(kw, wo), :]
                    else:
                        lhs = row[0, 0, pl.ds(kw, wo, stride=stride), :]
                    part = jnp.dot(lhs, w_ref[kh, kw],
                                   preferred_element_type=jnp.float32)
                    acc = part if acc is None else acc + part
            y = jnp.maximum(acc + bias, 0.0)
            o_ref[0, i] = y.astype(o_ref.dtype)

    return kernel


def grouped_conv3x3_bn_relu(x, w_bd, bias, *, stride, out_dtype=jnp.bfloat16,
                            rows_target=8):
    """x: (N,H,W,C) bf16; w_bd: (3,3,C,C) block-diagonal BN-folded bf16;
    bias: (C,) f32 (BN-folded)."""
    N, H, W, C = x.shape
    Ho = (H - 1) // stride + 1
    Wo = (W - 1) // stride + 1
    Wp = W + 2

    # Zero padding == conv padding=1.  This is the only XLA-side data prep.
    xp = jnp.pad(x, ((0, 0), (1, 1), (1, 1), (0, 0)))

    R = _largest_divisor_leq(Ho, max(1, rows_target // stride))
    n_taps = (R - 1) * stride + 3

    tap_specs = [
        pl.BlockSpec((1, 1, Wp, C),
                     (lambda n, m, j=j: (n, m * R * stride + j, 0, 0)))
        for j in range(n_taps)
    ]
    in_specs = tap_specs + [
        pl.BlockSpec((3, 3, C, C), lambda n, m: (0, 0, 0, 0)),
        pl.BlockSpec((1, C), lambda n, m: (0, 0)),
    ]
    args = [xp] * n_taps + [w_bd, bias.reshape(1, C)]

    return pl.pallas_call(
        _make_conv3x3_kernel(R, stride),
        out_shape=jax.ShapeDtypeStruct((N, Ho, Wo, C), out_dtype),
        grid_spec=pltpu.PrefetchScalarGridSpec(
            num_scalar_prefetch=0,
            grid=(N, Ho // R),
            in_specs=in_specs,
            out_specs=pl.BlockSpec((1, R, Wo, C), lambda n, m: (n, m, 0, 0)),
        ),
        compiler_params=pltpu.CompilerParams(
            dimension_semantics=("parallel", "parallel"),
            vmem_limit_bytes=_VMEM_LIMIT),
    )(*args)


# ----------------------------------------------------------------------------
# Host-side parameter preparation (BN folding, block-diagonal grouped weight)
# ----------------------------------------------------------------------------
def _bn_fold(bn):
    gamma, beta, mean, var = bn
    scale = gamma * lax.rsqrt(var + EPS)
    shift = beta - mean * scale
    return scale, shift


def _fold_1x1(w_oihw, b, bn):
    """w_oihw: (Cout, Cin, 1, 1) -> bf16 (Cin, Cout) with BN folded; f32 bias."""
    scale, shift = _bn_fold(bn)
    w_mat = w_oihw[:, :, 0, 0].T * scale[None, :]
    return w_mat.astype(jnp.bfloat16), b * scale + shift


def _grouped_to_blockdiag(w, num_groups):
    """(Cout, Cin_per_group, 3, 3) grouped weight -> dense block-diagonal
    (3, 3, Cin, Cout)."""
    Cout, Cg_in, KH, KW = w.shape
    Cin = Cg_in * num_groups
    Cg_out = Cout // num_groups
    i_idx = jnp.arange(Cin)
    o_idx = jnp.arange(Cout)
    gathered = w[o_idx[None, :], (i_idx % Cg_in)[:, None], :, :]  # (Cin,Cout,3,3)
    mask = (i_idx[:, None] // Cg_in) == (o_idx[None, :] // Cg_out)
    full = gathered * mask[:, :, None, None].astype(w.dtype)
    return jnp.transpose(full, (2, 3, 0, 1))                       # (3,3,Cin,Cout)


def _fold_grouped(w, b, bn, num_groups):
    scale, shift = _bn_fold(bn)
    w_bd = _grouped_to_blockdiag(w, num_groups) * scale[None, None, None, :]
    return w_bd.astype(jnp.bfloat16), b * scale + shift


# ----------------------------------------------------------------------------
# ResNeXtBlock forward (wrapper / glue)
# ----------------------------------------------------------------------------
def resnext_block_forward(x_nchw, params, *, groups, stride, use_1x1conv):
    x = jnp.transpose(x_nchw, (0, 2, 3, 1))             # NHWC f32
    N, H, W, Cin = x.shape
    Cb = params["w1"].shape[0]                          # bot_channels
    G = Cb // groups                                    # conv2 group count

    x_bf = x.astype(jnp.bfloat16)

    # conv1 (1x1) + bn1 + relu
    w1f, b1f = _fold_1x1(params["w1"], params["b1"], params["bn1"])
    y1 = pointwise_conv_bias(x_bf.reshape(N * H * W, Cin), w1f, b1f,
                             relu=True, out_dtype=jnp.bfloat16)
    y1 = y1.reshape(N, H, W, Cb)

    # conv2 (3x3 grouped, stride, pad 1) + bn2 + relu
    w2f, b2f = _fold_grouped(params["w2"], params["b2"], params["bn2"], G)
    y2 = grouped_conv3x3_bn_relu(y1, w2f, b2f, stride=stride,
                                 out_dtype=jnp.bfloat16)
    Ho, Wo = y2.shape[1], y2.shape[2]

    # shortcut branch
    if use_1x1conv:
        w4f, b4f = _fold_1x1(params["w4"], params["b4"], params["bn4"])
        # TODO(synk): fold this stride into the pointwise BlockSpec index_map
        # instead of an XLA strided slice (no-op for stride == 1).
        xs_in = x_bf if stride == 1 else x_bf[:, ::stride, ::stride, :]
        xs = pointwise_conv_bias(xs_in.reshape(N * Ho * Wo, Cin), w4f, b4f,
                                 relu=False, out_dtype=jnp.float32)
    else:
        xs = x.reshape(N * Ho * Wo, Cin)

    # conv3 (1x1) + bn3, fused residual add + final relu
    w3f, b3f = _fold_1x1(params["w3"], params["b3"], params["bn3"])
    out2d = pointwise_conv_bias(y2.reshape(N * Ho * Wo, Cb), w3f, b3f,
                                relu=True, residual=xs, out_dtype=jnp.float32)
    out = out2d.reshape(N, Ho, Wo, out2d.shape[1])
    return jnp.transpose(out, (0, 3, 1, 2))             # back to NCHW


# ----------------------------------------------------------------------------
# Deterministic parameter init (mimics PyTorch default conv init ranges)
# ----------------------------------------------------------------------------
def init_params(key, in_channels, num_channels, groups, bot_mul, use_1x1conv):
    Cb = int(round(num_channels * bot_mul))
    G = Cb // groups
    Cg = Cb // G
    keys = iter(jax.random.split(key, 40))

    def conv(shape):
        fan_in = shape[1] * shape[2] * shape[3]
        bound = 1.0 / (fan_in ** 0.5)
        w = jax.random.uniform(next(keys), shape, jnp.float32, -bound, bound)
        b = jax.random.uniform(next(keys), (shape[0],), jnp.float32, -bound, bound)
        return w, b

    def bn(n):
        gamma = jax.random.uniform(next(keys), (n,), jnp.float32, 0.5, 1.5)
        beta = 0.1 * jax.random.normal(next(keys), (n,), jnp.float32)
        mean = 0.1 * jax.random.normal(next(keys), (n,), jnp.float32)
        var = jax.random.uniform(next(keys), (n,), jnp.float32, 0.5, 1.5)
        return (gamma, beta, mean, var)

    p = {}
    p["w1"], p["b1"] = conv((Cb, in_channels, 1, 1))
    p["w2"], p["b2"] = conv((Cb, Cg, 3, 3))
    p["w3"], p["b3"] = conv((Cb, Cb, 1, 1))
    p["bn1"], p["bn2"], p["bn3"] = bn(Cb), bn(Cb), bn(Cb)
    if use_1x1conv:
        p["w4"], p["b4"] = conv((num_channels, in_channels, 1, 1))
        p["bn4"] = bn(num_channels)
    return p


# ----------------------------------------------------------------------------
# Pure-JAX reference (NCHW, mirrors the PyTorch forward in eval mode)
# ----------------------------------------------------------------------------
def reference_forward(x, params, *, groups, stride, use_1x1conv):
    dn = ("NCHW", "OIHW", "NCHW")

    def bn(y, p):
        gamma, beta, mean, var = (t[None, :, None, None] for t in p)
        return (y - mean) * lax.rsqrt(var + EPS) * gamma + beta

    Cb = params["w1"].shape[0]
    G = Cb // groups
    y = lax.conv_general_dilated(x, params["w1"], (1, 1), [(0, 0), (0, 0)],
                                 dimension_numbers=dn)
    y = jax.nn.relu(bn(y + params["b1"][None, :, None, None], params["bn1"]))
    y = lax.conv_general_dilated(y, params["w2"], (stride, stride),
                                 [(1, 1), (1, 1)], dimension_numbers=dn,
                                 feature_group_count=G)
    y = jax.nn.relu(bn(y + params["b2"][None, :, None, None], params["bn2"]))
    y = lax.conv_general_dilated(y, params["w3"], (1, 1), [(0, 0), (0, 0)],
                                 dimension_numbers=dn)
    y = bn(y + params["b3"][None, :, None, None], params["bn3"])
    xs = x
    if use_1x1conv:
        xs = lax.conv_general_dilated(x, params["w4"], (stride, stride),
                                      [(0, 0), (0, 0)], dimension_numbers=dn)
        xs = bn(xs + params["b4"][None, :, None, None], params["bn4"])
    return jax.nn.relu(y + xs)


if __name__ == "__main__":
    # Small config consistent with the module: bot_mul=1 -> bot_channels == num_channels
    num_channels = 32
    groups = 8
    bot_mul = 1.0
    use_1x1conv = True
    stride = 1
    N, H, W = 2, 16, 16

    key = jax.random.PRNGKey(0)
    kx, kp = jax.random.split(key)
    x = jax.random.normal(kx, (N, num_channels, H, W), jnp.float32)   # NCHW input
    params = init_params(kp, num_channels, num_channels, groups, bot_mul,
                         use_1x1conv)

    out = resnext_block_forward(x, params, groups=groups, stride=stride,
                                use_1x1conv=use_1x1conv)
    out = jax.block_until_ready(out)

    ref = reference_forward(x, params, groups=groups, stride=stride,
                            use_1x1conv=use_1x1conv)
    assert out.shape == ref.shape, (out.shape, ref.shape)
    max_err = float(jnp.max(jnp.abs(out - ref)))
    # bf16 matmul inputs (f32 accumulation) -> slightly looser tolerance.
    assert jnp.allclose(out, ref, atol=3e-2, rtol=3e-2), max_err

    print("KERNEL_OK")
</pallas_src>

<mosaic_0001>
module attributes {stable_mosaic.version = 11 : i64} {
  func.func @kernel(%arg0: i32, %arg1: memref<512x32xbf16, #tpu.memory_space<vmem>>, %arg2: memref<32x32xbf16, #tpu.memory_space<vmem>>, %arg3: memref<1x32xf32, #tpu.memory_space<vmem>>, %arg4: memref<512x32xbf16, #tpu.memory_space<vmem>>) attributes {dimension_semantics = [#tpu.dimension_semantics<parallel>], iteration_bounds = array<i64: 1>, scalar_prefetch = 0 : i64, scratch_operands = 0 : i64, tpu.core_type = #tpu.core_type<tc>, window_params = [{transform_indices = @transform_0, window_bounds = array<i64: 512, 32>}, {pipeline_mode = #tpu.pipeline_mode<synchronous>, transform_indices = @transform_1, window_bounds = array<i64: 32, 32>}, {pipeline_mode = #tpu.pipeline_mode<synchronous>, transform_indices = @transform_2, window_bounds = array<i64: 1, 32>}, {transform_indices = @transform_3, window_bounds = array<i64: 512, 32>}]} {
    %c0 = arith.constant 0 : index
    %c0_0 = arith.constant 0 : index
    %0 = vector.load %arg1[%c0, %c0_0] : memref<512x32xbf16, #tpu.memory_space<vmem>>, vector<512x32xbf16>
    %c0_1 = arith.constant 0 : index
    %c0_2 = arith.constant 0 : index
    %1 = vector.load %arg2[%c0_1, %c0_2] : memref<32x32xbf16, #tpu.memory_space<vmem>>, vector<32x32xbf16>
    %cst = arith.constant dense<0.000000e+00> : vector<512x32xf32>
    %2 = tpu.matmul %0, %1, %cst {dimension_numbers = #tpu.dot_dimension_numbers<[1], [0], [0], [1], [0, 0, 1, 1], [], []>} : vector<512x32xbf16>, vector<32x32xbf16>, vector<512x32xf32> -> vector<512x32xf32>
    %c0_3 = arith.constant 0 : index
    %c0_4 = arith.constant 0 : index
    %3 = vector.load %arg3[%c0_3, %c0_4] : memref<1x32xf32, #tpu.memory_space<vmem>>, vector<1x32xf32>
    %4 = vector.broadcast %3 : vector<1x32xf32> to vector<512x32xf32>
    %5 = arith.addf %2, %4 : vector<512x32xf32>
    %cst_5 = arith.constant 0.000000e+00 : f32
    %6 = vector.broadcast %cst_5 : f32 to vector<512x32xf32>
    %7 = arith.maximumf %5, %6 : vector<512x32xf32>
    %8 = arith.truncf %7 : vector<512x32xf32> to vector<512x32xbf16>
    %c0_6 = arith.constant 0 : index
    %c0_7 = arith.constant 0 : index
    %9 = vector.load %arg4[%c0_6, %c0_7] : memref<512x32xbf16, #tpu.memory_space<vmem>>, vector<512x32xbf16>
    tpu.vector_store %arg4[%c0_6, %c0_7], %8 {strides = array<i32>} : memref<512x32xbf16, #tpu.memory_space<vmem>>, vector<512x32xbf16>,
    return
  }
  func.func @transform_0(%arg0: i32) -> (i32, i32) {
    %c0_i32 = arith.constant 0 : i32
    %c0_i32_0 = arith.constant 0 : i32
    return %arg0, %c0_i32 : i32, i32
  }
  func.func @transform_1(%arg0: i32) -> (i32, i32) {
    %c0_i32 = arith.constant 0 : i32
    %c0_i32_0 = arith.constant 0 : i32
    %c0_i32_1 = arith.constant 0 : i32
    return %c0_i32, %c0_i32_0 : i32, i32
  }
  func.func @transform_2(%arg0: i32) -> (i32, i32) {
    %c0_i32 = arith.constant 0 : i32
    %c0_i32_0 = arith.constant 0 : i32
    %c0_i32_1 = arith.constant 0 : i32
    return %c0_i32, %c0_i32_0 : i32, i32
  }
  func.func @transform_3(%arg0: i32) -> (i32, i32) {
    %c0_i32 = arith.constant 0 : i32
    %c0_i32_0 = arith.constant 0 : i32
    return %arg0, %c0_i32 : i32, i32
  }
}

</mosaic_0001>

<llo_original>
// kernel: tpu_custom_call.1
$region0: #{tpu_custom_call.1}
  #allocation0 [shape = 'u32[]', space=smem, size = 0x4, offset = 0x4, fixed_abs, tag = 'smem constant byte address 0x4 - core index']
  #allocation1 [shape = 'u32[144,128]{1,0:T(1,128)}', space=vmem, size = 0x12000, scoped, tag = 'internal scratch']
  %s0 = inlined_call_operand.vmem [shape: bf16[512,32], index: 0, kind: input, shape index: {}]
  %s1 = inlined_call_operand.vmem [shape: bf16[32,32], index: 1, kind: input, shape index: {}]
  %s2 = inlined_call_operand.vmem [shape: f32[1,32], index: 2, kind: input, shape index: {}]
  %s3 = inlined_call_operand.vmem [shape: bf16[512,32], index: 3, kind: output, shape index: {}]
  %s4 = sld [smem:[#allocation0]]
  $region22: #{tpu_custom_call.1} parent=0
    _
  %s6 = ssub.s32 1, %s4
  %s7 = scalar_select 0, %s6, %s4
  // Predicated region
  $region2: #{tpu_custom_call.1} parent=0 // pred_check
    _
  $region3: #{tpu_custom_call.1} parent=0 // pred_check_branch
    %9 = sbr.rel (0) target = $region5
  $region4: #{tpu_custom_call.1} parent=0 // pred_region
    _
  $region5: #{tpu_custom_call.1} parent=0 // pred_fallthru
    _
  // Predicated region
  $region6: #{tpu_custom_call.1} parent=0 // pred_check
    _
  $region7: #{tpu_custom_call.1} parent=0 // pred_check_branch
    %11 = sbr.rel (0) target = $region9
  $region8: #{tpu_custom_call.1} parent=0 // pred_region
    _
  $region9: #{tpu_custom_call.1} parent=0 // pred_fallthru
    _
  // Predicated region
  $region10: #{tpu_custom_call.1} parent=0 // pred_check
    _
  $region11: #{tpu_custom_call.1} parent=0 // pred_check_branch
    %13 = sbr.rel (0) target = $region13
  $region12: #{tpu_custom_call.1} parent=0 // pred_region
    _
  $region13: #{tpu_custom_call.1} parent=0 // pred_fallthru
    _
  %v15 = vld [vmem:[%s0] sm:$0xf]
  %v16 = vld [vmem:[%s0 + $0x4] sm:$0xf]
  %v17 = vld [vmem:[%s0 + $0x8] sm:$0xf]
  %v18 = vld [vmem:[%s0 + $0xc] sm:$0xf]
  %v19 = vld [vmem:[%s0 + $0x10] sm:$0xf]
  %v20 = vld [vmem:[%s0 + $0x14] sm:$0xf]
  %v21 = vld [vmem:[%s0 + $0x18] sm:$0xf]
  %v22 = vld [vmem:[%s0 + $0x1c] sm:$0xf]
  %v23 = vld [vmem:[%s0 + $0x20] sm:$0xf]
  %v24 = vld [vmem:[%s0 + $0x24] sm:$0xf]
  %v25 = vld [vmem:[%s0 + $0x28] sm:$0xf]
  %v26 = vld [vmem:[%s0 + $0x2c] sm:$0xf]
  %v27 = vld [vmem:[%s0 + $0x30] sm:$0xf]
  %v28 = vld [vmem:[%s0 + $0x34] sm:$0xf]
  %v29 = vld [vmem:[%s0 + $0x38] sm:$0xf]
  %v30 = vld [vmem:[%s0 + $0x3c] sm:$0xf]
  %v31 = vld [vmem:[%s0 + $0x40] sm:$0xf]
  %v32 = vld [vmem:[%s0 + $0x44] sm:$0xf]
  %v33 = vld [vmem:[%s0 + $0x48] sm:$0xf]
  %v34 = vld [vmem:[%s0 + $0x4c] sm:$0xf]
  %v35 = vld [vmem:[%s0 + $0x50] sm:$0xf]
  %v36 = vld [vmem:[%s0 + $0x54] sm:$0xf]
  %v37 = vld [vmem:[%s0 + $0x58] sm:$0xf]
  %v38 = vld [vmem:[%s0 + $0x5c] sm:$0xf]
  %v39 = vld [vmem:[%s0 + $0x60] sm:$0xf]
  %v40 = vld [vmem:[%s0 + $0x64] sm:$0xf]
  %v41 = vld [vmem:[%s0 + $0x68] sm:$0xf]
  %v42 = vld [vmem:[%s0 + $0x6c] sm:$0xf]
  %v43 = vld [vmem:[%s0 + $0x70] sm:$0xf]
  %v44 = vld [vmem:[%s0 + $0x74] sm:$0xf]
  %v45 = vld [vmem:[%s0 + $0x78] sm:$0xf]
  %v46 = vld [vmem:[%s0 + $0x7c] sm:$0xf]
  %v47 = vld [vmem:[%s0 + $0x80] sm:$0xf]
  %v48 = vld [vmem:[%s0 + $0x84] sm:$0xf]
  %v49 = vld [vmem:[%s0 + $0x88] sm:$0xf]
  %v50 = vld [vmem:[%s0 + $0x8c] sm:$0xf]
  %v51 = vld [vmem:[%s0 + $0x90] sm:$0xf]
  %v52 = vld [vmem:[%s0 + $0x94] sm:$0xf]
  %v53 = vld [vmem:[%s0 + $0x98] sm:$0xf]
  %v54 = vld [vmem:[%s0 + $0x9c] sm:$0xf]
  %v55 = vld [vmem:[%s0 + $0xa0] sm:$0xf]
  %v56 = vld [vmem:[%s0 + $0xa4] sm:$0xf]
  %v57 = vld [vmem:[%s0 + $0xa8] sm:$0xf]
  %v58 = vld [vmem:[%s0 + $0xac] sm:$0xf]
  %v59 = vld [vmem:[%s0 + $0xb0] sm:$0xf]
  %v60 = vld [vmem:[%s0 + $0xb4] sm:$0xf]
  %v61 = vld [vmem:[%s0 + $0xb8] sm:$0xf]
  %v62 = vld [vmem:[%s0 + $0xbc] sm:$0xf]
  %v63 = vld [vmem:[%s0 + $0xc0] sm:$0xf]
  %v64 = vld [vmem:[%s0 + $0xc4] sm:$0xf]
  %v65 = vld [vmem:[%s0 + $0xc8] sm:$0xf]
  %v66 = vld [vmem:[%s0 + $0xcc] sm:$0xf]
  %v67 = vld [vmem:[%s0 + $0xd0] sm:$0xf]
  %v68 = vld [vmem:[%s0 + $0xd4] sm:$0xf]
  %v69 = vld [vmem:[%s0 + $0xd8] sm:$0xf]
  %v70 = vld [vmem:[%s0 + $0xdc] sm:$0xf]
  %v71 = vld [vmem:[%s0 + $0xe0] sm:$0xf]
  %v72 = vld [vmem:[%s0 + $0xe4] sm:$0xf]
  %v73 = vld [vmem:[%s0 + $0xe8] sm:$0xf]
  %v74 = vld [vmem:[%s0 + $0xec] sm:$0xf]
  %v75 = vld [vmem:[%s0 + $0xf0] sm:$0xf]
  %v76 = vld [vmem:[%s0 + $0xf4] sm:$0xf]
  %v77 = vld [vmem:[%s0 + $0xf8] sm:$0xf]
  %v78 = vld [vmem:[%s0 + $0xfc] sm:$0xf]
  %v79 = vld [vmem:[%s1] sm:$0xf]
  %v80 = vld [vmem:[%s1 + $0x4] sm:$0xf]
  %v81 = vld [vmem:[%s1 + $0x8] sm:$0xf]
  %v82 = vld [vmem:[%s1 + $0xc] sm:$0xf]
  %v83 = vld [vmem:[%s2] sm:$0x1]
  %v85 = vlaneseq
  %v86 = vshrl.u32 %v85, 7
  %v87 = vsub.s32 0, %v86
  %v88 = vrot.slane %v83, %v87
  %v154 = vunpack.c.l.b16 %v15
  %v155 = vunpack.c.l.b16 %v16
  %v156 = vunpack.c.l.b16 %v17
  %v157 = vunpack.c.l.b16 %v18
  %v158 = vunpack.c.l.b16 %v19
  %v159 = vunpack.c.l.b16 %v20
  %v160 = vunpack.c.l.b16 %v21
  %v161 = vunpack.c.l.b16 %v22
  %v162 = vunpack.c.l.b16 %v23
  %v163 = vunpack.c.l.b16 %v24
  %v164 = vunpack.c.l.b16 %v25
  %v165 = vunpack.c.l.b16 %v26
  %v166 = vunpack.c.l.b16 %v27
  %v167 = vunpack.c.l.b16 %v28
  %v168 = vunpack.c.l.b16 %v29
  %v169 = vunpack.c.l.b16 %v30
  %v170 = vunpack.c.l.b16 %v31
  %v171 = vunpack.c.l.b16 %v32
  %v172 = vunpack.c.l.b16 %v33
  %v173 = vunpack.c.l.b16 %v34
  %v174 = vunpack.c.l.b16 %v35
  %v175 = vunpack.c.l.b16 %v36
  %v176 = vunpack.c.l.b16 %v37
  %v177 = vunpack.c.l.b16 %v38
  %v178 = vunpack.c.l.b16 %v39
  %v179 = vunpack.c.l.b16 %v40
  %v180 = vunpack.c.l.b16 %v41
  %v181 = vunpack.c.l.b16 %v42
  %v182 = vunpack.c.l.b16 %v43
  %v183 = vunpack.c.l.b16 %v44
  %v184 = vunpack.c.l.b16 %v45
  %v185 = vunpack.c.l.b16 %v46
  %v186 = vunpack.c.l.b16 %v47
  %v187 = vunpack.c.l.b16 %v48
  %v188 = vunpack.c.l.b16 %v49
  %v189 = vunpack.c.l.b16 %v50
  %v190 = vunpack.c.l.b16 %v51
  %v191 = vunpack.c.l.b16 %v52
  %v192 = vunpack.c.l.b16 %v53
  %v193 = vunpack.c.l.b16 %v54
  %v194 = vunpack.c.l.b16 %v55
  %v195 = vunpack.c.l.b16 %v56
  %v196 = vunpack.c.l.b16 %v57
  %v197 = vunpack.c.l.b16 %v58
  %v198 = vunpack.c.l.b16 %v59
  %v199 = vunpack.c.l.b16 %v60
  %v200 = vunpack.c.l.b16 %v61
  %v201 = vunpack.c.l.b16 %v62
  %v202 = vunpack.c.l.b16 %v63
  %v203 = vunpack.c.l.b16 %v64
  %v204 = vunpack.c.l.b16 %v65
  %v205 = vunpack.c.l.b16 %v66
  %v206 = vunpack.c.l.b16 %v67
  %v207 = vunpack.c.l.b16 %v68
  %v208 = vunpack.c.l.b16 %v69
  %v209 = vunpack.c.l.b16 %v70
  %v210 = vunpack.c.l.b16 %v71
  %v211 = vunpack.c.l.b16 %v72
  %v212 = vunpack.c.l.b16 %v73
  %v213 = vunpack.c.l.b16 %v74
  %v214 = vunpack.c.l.b16 %v75
  %v215 = vunpack.c.l.b16 %v76
  %v216 = vunpack.c.l.b16 %v77
  %v217 = vunpack.c.l.b16 %v78
  %v218 = vpack.c.b16 %v155, %v154
  %v219 = vpack.c.b16 %v157, %v156
  %v220 = vpack.c.b16 %v159, %v158
  %v221 = vpack.c.b16 %v161, %v160
  %v222 = vpack.c.b16 %v163, %v162
  %v223 = vpack.c.b16 %v165, %v164
  %v224 = vpack.c.b16 %v167, %v166
  %v225 = vpack.c.b16 %v169, %v168
  %v226 = vpack.c.b16 %v171, %v170
  %v227 = vpack.c.b16 %v173, %v172
  %v228 = vpack.c.b16 %v175, %v174
  %v229 = vpack.c.b16 %v177, %v176
  %v230 = vpack.c.b16 %v179, %v178
  %v231 = vpack.c.b16 %v181, %v180
  %v232 = vpack.c.b16 %v183, %v182
  %v233 = vpack.c.b16 %v185, %v184
  %v234 = vpack.c.b16 %v187, %v186
  %v235 = vpack.c.b16 %v189, %v188
  %v236 = vpack.c.b16 %v191, %v190
  %v237 = vpack.c.b16 %v193, %v192
  %v238 = vpack.c.b16 %v195, %v194
  %v239 = vpack.c.b16 %v197, %v196
  %v240 = vpack.c.b16 %v199, %v198
  %v241 = vpack.c.b16 %v201, %v200
  %v242 = vpack.c.b16 %v203, %v202
  %v243 = vpack.c.b16 %v205, %v204
  %v244 = vpack.c.b16 %v207, %v206
  %v245 = vpack.c.b16 %v209, %v208
  %v246 = vpack.c.b16 %v211, %v210
  %v247 = vpack.c.b16 %v213, %v212
  %v248 = vpack.c.b16 %v215, %v214
  %v249 = vpack.c.b16 %v217, %v216
  %v254 = vunpack.c.l.b16 %v79
  %v255 = vunpack.c.l.b16 %v80
  %v256 = vunpack.c.l.b16 %v81
  %v257 = vunpack.c.l.b16 %v82
  %v258 = vpack.c.b16 %v255, %v254
  %v259 = vpack.c.b16 %v257, %v256
  %vm262 = vcmask 261120
  %v264 = vsel %vm262, %v218, 0
  %v267 = vsel %vm262, %v219, 0
  %v270 = vsel %vm262, %v220, 0
  %v273 = vsel %vm262, %v221, 0
  %v276 = vsel %vm262, %v222, 0
  %v279 = vsel %vm262, %v223, 0
  %v282 = vsel %vm262, %v224, 0
  %v285 = vsel %vm262, %v225, 0
  %v288 = vsel %vm262, %v226, 0
  %v291 = vsel %vm262, %v227, 0
  %v294 = vsel %vm262, %v228, 0
  %v297 = vsel %vm262, %v229, 0
  %v300 = vsel %vm262, %v230, 0
  %v303 = vsel %vm262, %v231, 0
  %v306 = vsel %vm262, %v232, 0
  %v309 = vsel %vm262, %v233, 0
  %v312 = vsel %vm262, %v234, 0
  %v315 = vsel %vm262, %v235, 0
  %v318 = vsel %vm262, %v236, 0
  %v321 = vsel %vm262, %v237, 0
  %v324 = vsel %vm262, %v238, 0
  %v327 = vsel %vm262, %v239, 0
  %v330 = vsel %vm262, %v240, 0
  %v333 = vsel %vm262, %v241, 0
  %v336 = vsel %vm262, %v242, 0
  %v339 = vsel %vm262, %v243, 0
  %v342 = vsel %vm262, %v244, 0
  %v345 = vsel %vm262, %v245, 0
  %v348 = vsel %vm262, %v246, 0
  %v351 = vsel %vm262, %v247, 0
  %v354 = vsel %vm262, %v248, 0
  %v357 = vsel %vm262, %v249, 0
  %359 = vmatprep.subr.bf16.mxu0 0
  %360 = vmatpush1.bf16.msra.mxu0 0
  %361 = vmatprep.subr.bf16.mxu0 0
  %362 = vmatpush1.bf16.msra.mxu0 0
  %363 = vmatprep.subr.bf16.mxu0 0
  %364 = vmatpush1.bf16.msra.mxu0 0
  %365 = vmatprep.subr.bf16.mxu0 0
  %366 = vmatpush1.bf16.msra.mxu0 0
  %367 = vmatprep.subr.bf16.mxu0 0
  %368 = vmatpush1.bf16.msra.mxu0 0
  %369 = vmatprep.subr.bf16.mxu0 0
  %370 = vmatpush1.bf16.msra.mxu0 0
  %371 = vmatprep.subr.bf16.mxu0 0
  %372 = vmatpush1.bf16.msra.mxu0 %v259
  %373 = vmatprep.subr.bf16.mxu0 0
  %374 = vmatpush1.bf16.msra.mxu0 %v258
  %375 = vmatprep.subr.bf16.mxu0 0
  %376 = vmatpush2.bf16.msra.mxu0 0
  %377 = vmatprep.subr.bf16.mxu0 0
  %378 = vmatpush2.bf16.msra.mxu0 0
  %379 = vmatprep.subr.bf16.mxu0 0
  %380 = vmatpush2.bf16.msra.mxu0 0
  %381 = vmatprep.subr.bf16.mxu0 0
  %382 = vmatpush2.bf16.msra.mxu0 0
  %383 = vmatprep.subr.bf16.mxu0 0
  %384 = vmatpush2.bf16.msra.mxu0 0
  %385 = vmatprep.subr.bf16.mxu0 0
  %386 = vmatpush2.bf16.msra.mxu0 0
  %387 = vmatprep.subr.bf16.mxu0 0
  %388 = vmatpush2.bf16.msra.mxu0 0
  %389 = vmatprep.subr.bf16.mxu0 0
  %390 = vmatpush2.bf16.msra.mxu0 0
  %391 = vmatprep.mubr.bf16.mxu0 0
  %392 = vmatmul.mubr.bf16.gmra.mxu0 %v264
  %v393 = vpop.f32.mrf.mxu0
  %v394 = vadd.f32 %v88, %v393
  %v395 = vpop.f32.mrf.mxu0
  %v396 = vpop.f32.mrf.mxu0
  %v397 = vadd.f32 %v88, %v396
  %v398 = vpop.f32.mrf.mxu0
  %399 = vmatprep.mubr.bf16.mxu0 0
  %400 = vmatmul.mubr.bf16.gmra.mxu0 %v267
  %v401 = vpop.f32.mrf.mxu0
  %v402 = vadd.f32 %v88, %v401
  %v403 = vpop.f32.mrf.mxu0
  %v404 = vpop.f32.mrf.mxu0
  %v405 = vadd.f32 %v88, %v404
  %v406 = vpop.f32.mrf.mxu0
  %407 = vmatprep.mubr.bf16.mxu0 0
  %408 = vmatmul.mubr.bf16.gmra.mxu0 %v270
  %v409 = vpop.f32.mrf.mxu0
  %v410 = vadd.f32 %v88, %v409
  %v411 = vpop.f32.mrf.mxu0
  %v412 = vpop.f32.mrf.mxu0
  %v413 = vadd.f32 %v88, %v412
  %v414 = vpop.f32.mrf.mxu0
  %415 = vmatprep.mubr.bf16.mxu0 0
  %416 = vmatmul.mubr.bf16.gmra.mxu0 %v273
  %v417 = vpop.f32.mrf.mxu0
  %v418 = vadd.f32 %v88, %v417
  %v419 = vpop.f32.mrf.mxu0
  %v420 = vpop.f32.mrf.mxu0
  %v421 = vadd.f32 %v88, %v420
  %v422 = vpop.f32.mrf.mxu0
  %423 = vmatprep.mubr.bf16.mxu0 0
  %424 = vmatmul.mubr.bf16.gmra.mxu0 %v276
  %v425 = vpop.f32.mrf.mxu0
  %v426 = vadd.f32 %v88, %v425
  %v427 = vpop.f32.mrf.mxu0
  %v428 = vpop.f32.mrf.mxu0
  %v429 = vadd.f32 %v88, %v428
  %v430 = vpop.f32.mrf.mxu0
  %431 = vmatprep.mubr.bf16.mxu0 0
  %432 = vmatmul.mubr.bf16.gmra.mxu0 %v279
  %v433 = vpop.f32.mrf.mxu0
  %v434 = vadd.f32 %v88, %v433
  %v435 = vpop.f32.mrf.mxu0
  %v436 = vpop.f32.mrf.mxu0
  %v437 = vadd.f32 %v88, %v436
  %v438 = vpop.f32.mrf.mxu0
  %439 = vmatprep.mubr.bf16.mxu0 0
  %440 = vmatmul.mubr.bf16.gmra.mxu0 %v282
  %v441 = vpop.f32.mrf.mxu0
  %v442 = vadd.f32 %v88, %v441
  %v443 = vpop.f32.mrf.mxu0
  %v444 = vpop.f32.mrf.mxu0
  %v445 = vadd.f32 %v88, %v444
  %v446 = vpop.f32.mrf.mxu0
  %447 = vmatprep.mubr.bf16.mxu0 0
  %448 = vmatmul.mubr.bf16.gmra.mxu0 %v285
  %v449 = vpop.f32.mrf.mxu0
  %v450 = vadd.f32 %v88, %v449
  %v451 = vpop.f32.mrf.mxu0
  %v452 = vpop.f32.mrf.mxu0
  %v453 = vadd.f32 %v88, %v452
  %v454 = vpop.f32.mrf.mxu0
  %455 = vmatprep.mubr.bf16.mxu0 0
  %456 = vmatmul.mubr.bf16.gmra.mxu0 %v288
  %v457 = vpop.f32.mrf.mxu0
  %v458 = vadd.f32 %v88, %v457
  %v459 = vpop.f32.mrf.mxu0
  %v460 = vpop.f32.mrf.mxu0
  %v461 = vadd.f32 %v88, %v460
  %v462 = vpop.f32.mrf.mxu0
  %463 = vmatprep.mubr.bf16.mxu0 0
  %464 = vmatmul.mubr.bf16.gmra.mxu0 %v291
  %v465 = vpop.f32.mrf.mxu0
  %v466 = vadd.f32 %v88, %v465
  %v467 = vpop.f32.mrf.mxu0
  %v468 = vpop.f32.mrf.mxu0
  %v469 = vadd.f32 %v88, %v468
  %v470 = vpop.f32.mrf.mxu0
  %471 = vmatprep.mubr.bf16.mxu0 0
  %472 = vmatmul.mubr.bf16.gmra.mxu0 %v294
  %v473 = vpop.f32.mrf.mxu0
  %v474 = vadd.f32 %v88, %v473
  %v475 = vpop.f32.mrf.mxu0
  %v476 = vpop.f32.mrf.mxu0
  %v477 = vadd.f32 %v88, %v476
  %v478 = vpop.f32.mrf.mxu0
  %479 = vmatprep.mubr.bf16.mxu0 0
  %480 = vmatmul.mubr.bf16.gmra.mxu0 %v297
  %v481 = vpop.f32.mrf.mxu0
  %v482 = vadd.f32 %v88, %v481
  %v483 = vpop.f32.mrf.mxu0
  %v484 = vpop.f32.mrf.mxu0
  %v485 = vadd.f32 %v88, %v484
  %v486 = vpop.f32.mrf.mxu0
  %487 = vmatprep.mubr.bf16.mxu0 0
  %488 = vmatmul.mubr.bf16.gmra.mxu0 %v300
  %v489 = vpop.f32.mrf.mxu0
  %v490 = vadd.f32 %v88, %v489
  %v491 = vpop.f32.mrf.mxu0
  %v492 = vpop.f32.mrf.mxu0
  %v493 = vadd.f32 %v88, %v492
  %v494 = vpop.f32.mrf.mxu0
  %495 = vmatprep.mubr.bf16.mxu0 0
  %496 = vmatmul.mubr.bf16.gmra.mxu0 %v303
  %v497 = vpop.f32.mrf.mxu0
  %v498 = vadd.f32 %v88, %v497
  %v499 = vpop.f32.mrf.mxu0
  %v500 = vpop.f32.mrf.mxu0
  %v501 = vadd.f32 %v88, %v500
  %v502 = vpop.f32.mrf.mxu0
  %503 = vmatprep.mubr.bf16.mxu0 0
  %504 = vmatmul.mubr.bf16.gmra.mxu0 %v306
  %v505 = vpop.f32.mrf.mxu0
  %v506 = vadd.f32 %v88, %v505
  %v507 = vpop.f32.mrf.mxu0
  %v508 = vpop.f32.mrf.mxu0
  %v509 = vadd.f32 %v88, %v508
  %v510 = vpop.f32.mrf.mxu0
  %511 = vmatprep.mubr.bf16.mxu0 0
  %512 = vmatmul.mubr.bf16.gmra.mxu0 %v309
  %v513 = vpop.f32.mrf.mxu0
  %v514 = vadd.f32 %v88, %v513
  %v515 = vpop.f32.mrf.mxu0
  %v516 = vpop.f32.mrf.mxu0
  %v517 = vadd.f32 %v88, %v516
  %v518 = vpop.f32.mrf.mxu0
  %519 = vmatprep.mubr.bf16.mxu0 0
  %520 = vmatmul.mubr.bf16.gmra.mxu0 %v312
  %v521 = vpop.f32.mrf.mxu0
  %v522 = vadd.f32 %v88, %v521
  %v523 = vpop.f32.mrf.mxu0
  %v524 = vpop.f32.mrf.mxu0
  %v525 = vadd.f32 %v88, %v524
  %v526 = vpop.f32.mrf.mxu0
  %527 = vmatprep.mubr.bf16.mxu0 0
  %528 = vmatmul.mubr.bf16.gmra.mxu0 %v315
  %v529 = vpop.f32.mrf.mxu0
  %v530 = vadd.f32 %v88, %v529
  %v531 = vpop.f32.mrf.mxu0
  %v532 = vpop.f32.mrf.mxu0
  %v533 = vadd.f32 %v88, %v532
  %v534 = vpop.f32.mrf.mxu0
  %535 = vmatprep.mubr.bf16.mxu0 0
  %536 = vmatmul.mubr.bf16.gmra.mxu0 %v318
  %v537 = vpop.f32.mrf.mxu0
  %v538 = vadd.f32 %v88, %v537
  %v539 = vpop.f32.mrf.mxu0
  %v540 = vpop.f32.mrf.mxu0
  %v541 = vadd.f32 %v88, %v540
  %v542 = vpop.f32.mrf.mxu0
  %543 = vmatprep.mubr.bf16.mxu0 0
  %544 = vmatmul.mubr.bf16.gmra.mxu0 %v321
  %v545 = vpop.f32.mrf.mxu0
  %v546 = vadd.f32 %v88, %v545
  %v547 = vpop.f32.mrf.mxu0
  %v548 = vpop.f32.mrf.mxu0
  %v549 = vadd.f32 %v88, %v548
  %v550 = vpop.f32.mrf.mxu0
  %551 = vmatprep.mubr.bf16.mxu0 0
  %552 = vmatmul.mubr.bf16.gmra.mxu0 %v324
  %v553 = vpop.f32.mrf.mxu0
  %v554 = vadd.f32 %v88, %v553
  %v555 = vpop.f32.mrf.mxu0
  %v556 = vpop.f32.mrf.mxu0
  %v557 = vadd.f32 %v88, %v556
  %v558 = vpop.f32.mrf.mxu0
  %559 = vmatprep.mubr.bf16.mxu0 0
  %560 = vmatmul.mubr.bf16.gmra.mxu0 %v327
  %v561 = vpop.f32.mrf.mxu0
  %v562 = vadd.f32 %v88, %v561
  %v563 = vpop.f32.mrf.mxu0
  %v564 = vpop.f32.mrf.mxu0
  %v565 = vadd.f32 %v88, %v564
  %v566 = vpop.f32.mrf.mxu0
  %567 = vmatprep.mubr.bf16.mxu0 0
  %568 = vmatmul.mubr.bf16.gmra.mxu0 %v330
  %v569 = vpop.f32.mrf.mxu0
  %v570 = vadd.f32 %v88, %v569
  %v571 = vpop.f32.mrf.mxu0
  %v572 = vpop.f32.mrf.mxu0
  %v573 = vadd.f32 %v88, %v572
  %v574 = vpop.f32.mrf.mxu0
  %575 = vmatprep.mubr.bf16.mxu0 0
  %576 = vmatmul.mubr.bf16.gmra.mxu0 %v333
  %v577 = vpop.f32.mrf.mxu0
  %v578 = vadd.f32 %v88, %v577
  %v579 = vpop.f32.mrf.mxu0
  %v580 = vpop.f32.mrf.mxu0
  %v581 = vadd.f32 %v88, %v580
  %v582 = vpop.f32.mrf.mxu0
  %583 = vmatprep.mubr.bf16.mxu0 0
  %584 = vmatmul.mubr.bf16.gmra.mxu0 %v336
  %v585 = vpop.f32.mrf.mxu0
  %v586 = vadd.f32 %v88, %v585
  %v587 = vpop.f32.mrf.mxu0
  %v588 = vpop.f32.mrf.mxu0
  %v589 = vadd.f32 %v88, %v588
  %v590 = vpop.f32.mrf.mxu0
  %591 = vmatprep.mubr.bf16.mxu0 0
  %592 = vmatmul.mubr.bf16.gmra.mxu0 %v339
  %v593 = vpop.f32.mrf.mxu0
  %v594 = vadd.f32 %v88, %v593
  %v595 = vpop.f32.mrf.mxu0
  %v596 = vpop.f32.mrf.mxu0
  %v597 = vadd.f32 %v88, %v596
  %v598 = vpop.f32.mrf.mxu0
  %599 = vmatprep.mubr.bf16.mxu0 0
  %600 = vmatmul.mubr.bf16.gmra.mxu0 %v342
  %v601 = vpop.f32.mrf.mxu0
  %v602 = vadd.f32 %v88, %v601
  %v603 = vpop.f32.mrf.mxu0
  %v604 = vpop.f32.mrf.mxu0
  %v605 = vadd.f32 %v88, %v604
  %v606 = vpop.f32.mrf.mxu0
  %607 = vmatprep.mubr.bf16.mxu0 0
  %608 = vmatmul.mubr.bf16.gmra.mxu0 %v345
  %v609 = vpop.f32.mrf.mxu0
  %v610 = vadd.f32 %v88, %v609
  %v611 = vpop.f32.mrf.mxu0
  %v612 = vpop.f32.mrf.mxu0
  %v613 = vadd.f32 %v88, %v612
  %v614 = vpop.f32.mrf.mxu0
  %615 = vmatprep.mubr.bf16.mxu0 0
  %616 = vmatmul.mubr.bf16.gmra.mxu0 %v348
  %v617 = vpop.f32.mrf.mxu0
  %v618 = vadd.f32 %v88, %v617
  %v619 = vpop.f32.mrf.mxu0
  %v620 = vpop.f32.mrf.mxu0
  %v621 = vadd.f32 %v88, %v620
  %v622 = vpop.f32.mrf.mxu0
  %623 = vmatprep.mubr.bf16.mxu0 0
  %624 = vmatmul.mubr.bf16.gmra.mxu0 %v351
  %v625 = vpop.f32.mrf.mxu0
  %v626 = vadd.f32 %v88, %v625
  %v627 = vpop.f32.mrf.mxu0
  %v628 = vpop.f32.mrf.mxu0
  %v629 = vadd.f32 %v88, %v628
  %v630 = vpop.f32.mrf.mxu0
  %631 = vmatprep.mubr.bf16.mxu0 0
  %632 = vmatmul.mubr.bf16.gmra.mxu0 %v354
  %v633 = vpop.f32.mrf.mxu0
  %v634 = vadd.f32 %v88, %v633
  %v635 = vpop.f32.mrf.mxu0
  %v636 = vpop.f32.mrf.mxu0
  %v637 = vadd.f32 %v88, %v636
  %v638 = vpop.f32.mrf.mxu0
  %639 = vmatprep.mubr.bf16.mxu0 0
  %640 = vmatmul.mubr.bf16.gmra.mxu0 %v357
  %v641 = vpop.f32.mrf.mxu0
  %v642 = vadd.f32 %v88, %v641
  %v643 = vpop.f32.mrf.mxu0
  %v644 = vpop.f32.mrf.mxu0
  %v645 = vadd.f32 %v88, %v644
  %v646 = vpop.f32.mrf.mxu0
  %647 = vdwg.mxu0
  %v648 = vmax.f32 %v394, 0.0
  %v649 = vmax.f32 %v397, 0.0
  %v650 = vmax.f32 %v402, 0.0
  %v651 = vmax.f32 %v405, 0.0
  %v652 = vmax.f32 %v410, 0.0
  %v653 = vmax.f32 %v413, 0.0
  %v654 = vmax.f32 %v418, 0.0
  %v655 = vmax.f32 %v421, 0.0
  %v656 = vmax.f32 %v426, 0.0
  %v657 = vmax.f32 %v429, 0.0
  %v658 = vmax.f32 %v434, 0.0
  %v659 = vmax.f32 %v437, 0.0
  %v660 = vmax.f32 %v442, 0.0
  %v661 = vmax.f32 %v445, 0.0
  %v662 = vmax.f32 %v450, 0.0
  %v663 = vmax.f32 %v453, 0.0
  %v664 = vmax.f32 %v458, 0.0
  %v665 = vmax.f32 %v461, 0.0
  %v666 = vmax.f32 %v466, 0.0
  %v667 = vmax.f32 %v469, 0.0
  %v668 = vmax.f32 %v474, 0.0
  %v669 = vmax.f32 %v477, 0.0
  %v670 = vmax.f32 %v482, 0.0
  %v671 = vmax.f32 %v485, 0.0
  %v672 = vmax.f32 %v490, 0.0
  %v673 = vmax.f32 %v493, 0.0
  %v674 = vmax.f32 %v498, 0.0
  %v675 = vmax.f32 %v501, 0.0
  %v676 = vmax.f32 %v506, 0.0
  %v677 = vmax.f32 %v509, 0.0
  %v678 = vmax.f32 %v514, 0.0
  %v679 = vmax.f32 %v517, 0.0
  %v680 = vmax.f32 %v522, 0.0
  %v681 = vmax.f32 %v525, 0.0
  %v682 = vmax.f32 %v530, 0.0
  %v683 = vmax.f32 %v533, 0.0
  %v684 = vmax.f32 %v538, 0.0
  %v685 = vmax.f32 %v541, 0.0
  %v686 = vmax.f32 %v546, 0.0
  %v687 = vmax.f32 %v549, 0.0
  %v688 = vmax.f32 %v554, 0.0
  %v689 = vmax.f32 %v557, 0.0
  %v690 = vmax.f32 %v562, 0.0
  %v691 = vmax.f32 %v565, 0.0
  %v692 = vmax.f32 %v570, 0.0
  %v693 = vmax.f32 %v573, 0.0
  %v694 = vmax.f32 %v578, 0.0
  %v695 = vmax.f32 %v581, 0.0
  %v696 = vmax.f32 %v586, 0.0
  %v697 = vmax.f32 %v589, 0.0
  %v698 = vmax.f32 %v594, 0.0
  %v699 = vmax.f32 %v597, 0.0
  %v700 = vmax.f32 %v602, 0.0
  %v701 = vmax.f32 %v605, 0.0
  %v702 = vmax.f32 %v610, 0.0
  %v703 = vmax.f32 %v613, 0.0
  %v704 = vmax.f32 %v618, 0.0
  %v705 = vmax.f32 %v621, 0.0
  %v706 = vmax.f32 %v626, 0.0
  %v707 = vmax.f32 %v629, 0.0
  %v708 = vmax.f32 %v634, 0.0
  %v709 = vmax.f32 %v637, 0.0
  %v710 = vmax.f32 %v642, 0.0
  %v711 = vmax.f32 %v645, 0.0
  %v712 = vpack.c.bf16 %v649, %v648
  %v713 = vpack.c.bf16 %v651, %v650
  %v714 = vpack.c.bf16 %v653, %v652
  %v715 = vpack.c.bf16 %v655, %v654
  %v716 = vpack.c.bf16 %v657, %v656
  %v717 = vpack.c.bf16 %v659, %v658
  %v718 = vpack.c.bf16 %v661, %v660
  %v719 = vpack.c.bf16 %v663, %v662
  %v720 = vpack.c.bf16 %v665, %v664
  %v721 = vpack.c.bf16 %v667, %v666
  %v722 = vpack.c.bf16 %v669, %v668
  %v723 = vpack.c.bf16 %v671, %v670
  %v724 = vpack.c.bf16 %v673, %v672
  %v725 = vpack.c.bf16 %v675, %v674
  %v726 = vpack.c.bf16 %v677, %v676
  %v727 = vpack.c.bf16 %v679, %v678
  %v728 = vpack.c.bf16 %v681, %v680
  %v729 = vpack.c.bf16 %v683, %v682
  %v730 = vpack.c.bf16 %v685, %v684
  %v731 = vpack.c.bf16 %v687, %v686
  %v732 = vpack.c.bf16 %v689, %v688
  %v733 = vpack.c.bf16 %v691, %v690
  %v734 = vpack.c.bf16 %v693, %v692
  %v735 = vpack.c.bf16 %v695, %v694
  %v736 = vpack.c.bf16 %v697, %v696
  %v737 = vpack.c.bf16 %v699, %v698
  %v738 = vpack.c.bf16 %v701, %v700
  %v739 = vpack.c.bf16 %v703, %v702
  %v740 = vpack.c.bf16 %v705, %v704
  %v741 = vpack.c.bf16 %v707, %v706
  %v742 = vpack.c.bf16 %v709, %v708
  %v743 = vpack.c.bf16 %v711, %v710
  %v776 = vunpack.c.l.b16 %v712
  %v777 = vunpack.c.h.b16 %v712
  %v778 = vunpack.c.l.b16 %v713
  %v779 = vunpack.c.h.b16 %v713
  %v780 = vunpack.c.l.b16 %v714
  %v781 = vunpack.c.h.b16 %v714
  %v782 = vunpack.c.l.b16 %v715
  %v783 = vunpack.c.h.b16 %v715
  %v784 = vunpack.c.l.b16 %v716
  %v785 = vunpack.c.h.b16 %v716
  %v786 = vunpack.c.l.b16 %v717
  %v787 = vunpack.c.h.b16 %v717
  %v788 = vunpack.c.l.b16 %v718
  %v789 = vunpack.c.h.b16 %v718
  %v790 = vunpack.c.l.b16 %v719
  %v791 = vunpack.c.h.b16 %v719
  %v792 = vunpack.c.l.b16 %v720
  %v793 = vunpack.c.h.b16 %v720
  %v794 = vunpack.c.l.b16 %v721
  %v795 = vunpack.c.h.b16 %v721
  %v796 = vunpack.c.l.b16 %v722
  %v797 = vunpack.c.h.b16 %v722
  %v798 = vunpack.c.l.b16 %v723
  %v799 = vunpack.c.h.b16 %v723
  %v800 = vunpack.c.l.b16 %v724
  %v801 = vunpack.c.h.b16 %v724
  %v802 = vunpack.c.l.b16 %v725
  %v803 = vunpack.c.h.b16 %v725
  %v804 = vunpack.c.l.b16 %v726
  %v805 = vunpack.c.h.b16 %v726
  %v806 = vunpack.c.l.b16 %v727
  %v807 = vunpack.c.h.b16 %v727
  %v808 = vunpack.c.l.b16 %v728
  %v809 = vunpack.c.h.b16 %v728
  %v810 = vunpack.c.l.b16 %v729
  %v811 = vunpack.c.h.b16 %v729
  %v812 = vunpack.c.l.b16 %v730
  %v813 = vunpack.c.h.b16 %v730
  %v814 = vunpack.c.l.b16 %v731
  %v815 = vunpack.c.h.b16 %v731
  %v816 = vunpack.c.l.b16 %v732
  %v817 = vunpack.c.h.b16 %v732
  %v818 = vunpack.c.l.b16 %v733
  %v819 = vunpack.c.h.b16 %v733
  %v820 = vunpack.c.l.b16 %v734
  %v821 = vunpack.c.h.b16 %v734
  %v822 = vunpack.c.l.b16 %v735
  %v823 = vunpack.c.h.b16 %v735
  %v824 = vunpack.c.l.b16 %v736
  %v825 = vunpack.c.h.b16 %v736
  %v826 = vunpack.c.l.b16 %v737
  %v827 = vunpack.c.h.b16 %v737
  %v828 = vunpack.c.l.b16 %v738
  %v829 = vunpack.c.h.b16 %v738
  %v830 = vunpack.c.l.b16 %v739
  %v831 = vunpack.c.h.b16 %v739
  %v832 = vunpack.c.l.b16 %v740
  %v833 = vunpack.c.h.b16 %v740
  %v834 = vunpack.c.l.b16 %v741
  %v835 = vunpack.c.h.b16 %v741
  %v836 = vunpack.c.l.b16 %v742
  %v837 = vunpack.c.h.b16 %v742
  %v838 = vunpack.c.l.b16 %v743
  %v839 = vunpack.c.h.b16 %v743
  %v840 = vpack.c.b16 %v776, %v776
  %v841 = vpack.c.b16 %v777, %v777
  %v842 = vpack.c.b16 %v778, %v778
  %v843 = vpack.c.b16 %v779, %v779
  %v844 = vpack.c.b16 %v780, %v780
  %v845 = vpack.c.b16 %v781, %v781
  %v846 = vpack.c.b16 %v782, %v782
  %v847 = vpack.c.b16 %v783, %v783
  %v848 = vpack.c.b16 %v784, %v784
  %v849 = vpack.c.b16 %v785, %v785
  %v850 = vpack.c.b16 %v786, %v786
  %v851 = vpack.c.b16 %v787, %v787
  %v852 = vpack.c.b16 %v788, %v788
  %v853 = vpack.c.b16 %v789, %v789
  %v854 = vpack.c.b16 %v790, %v790
  %v855 = vpack.c.b16 %v791, %v791
  %v856 = vpack.c.b16 %v792, %v792
  %v857 = vpack.c.b16 %v793, %v793
  %v858 = vpack.c.b16 %v794, %v794
  %v859 = vpack.c.b16 %v795, %v795
  %v860 = vpack.c.b16 %v796, %v796
  %v861 = vpack.c.b16 %v797, %v797
  %v862 = vpack.c.b16 %v798, %v798
  %v863 = vpack.c.b16 %v799, %v799
  %v864 = vpack.c.b16 %v800, %v800
  %v865 = vpack.c.b16 %v801, %v801
  %v866 = vpack.c.b16 %v802, %v802
  %v867 = vpack.c.b16 %v803, %v803
  %v868 = vpack.c.b16 %v804, %v804
  %v869 = vpack.c.b16 %v805, %v805
  %v870 = vpack.c.b16 %v806, %v806
  %v871 = vpack.c.b16 %v807, %v807
  %v872 = vpack.c.b16 %v808, %v808
  %v873 = vpack.c.b16 %v809, %v809
  %v874 = vpack.c.b16 %v810, %v810
  %v875 = vpack.c.b16 %v811, %v811
  %v876 = vpack.c.b16 %v812, %v812
  %v877 = vpack.c.b16 %v813, %v813
  %v878 = vpack.c.b16 %v814, %v814
  %v879 = vpack.c.b16 %v815, %v815
  %v880 = vpack.c.b16 %v816, %v816
  %v881 = vpack.c.b16 %v817, %v817
  %v882 = vpack.c.b16 %v818, %v818
  %v883 = vpack.c.b16 %v819, %v819
  %v884 = vpack.c.b16 %v820, %v820
  %v885 = vpack.c.b16 %v821, %v821
  %v886 = vpack.c.b16 %v822, %v822
  %v887 = vpack.c.b16 %v823, %v823
  %v888 = vpack.c.b16 %v824, %v824
  %v889 = vpack.c.b16 %v825, %v825
  %v890 = vpack.c.b16 %v826, %v826
  %v891 = vpack.c.b16 %v827, %v827
  %v892 = vpack.c.b16 %v828, %v828
  %v893 = vpack.c.b16 %v829, %v829
  %v894 = vpack.c.b16 %v830, %v830
  %v895 = vpack.c.b16 %v831, %v831
  %v896 = vpack.c.b16 %v832, %v832
  %v897 = vpack.c.b16 %v833, %v833
  %v898 = vpack.c.b16 %v834, %v834
  %v899 = vpack.c.b16 %v835, %v835
  %v900 = vpack.c.b16 %v836, %v836
  %v901 = vpack.c.b16 %v837, %v837
  %v902 = vpack.c.b16 %v838, %v838
  %v903 = vpack.c.b16 %v839, %v839
  %vm968 = vcmask 257024
  %969 = vst.msk [vmem:[%s3] sm:$0xf] %vm968, %v840
  %970 = vst.msk [vmem:[%s3 + $0x4] sm:$0xf] %vm968, %v841
  %971 = vst.msk [vmem:[%s3 + $0x8] sm:$0xf] %vm968, %v842
  %972 = vst.msk [vmem:[%s3 + $0xc] sm:$0xf] %vm968, %v843
  %973 = vst.msk [vmem:[%s3 + $0x10] sm:$0xf] %vm968, %v844
  %974 = vst.msk [vmem:[%s3 + $0x14] sm:$0xf] %vm968, %v845
  %975 = vst.msk [vmem:[%s3 + $0x18] sm:$0xf] %vm968, %v846
  %976 = vst.msk [vmem:[%s3 + $0x1c] sm:$0xf] %vm968, %v847
  %977 = vst.msk [vmem:[%s3 + $0x20] sm:$0xf] %vm968, %v848
  %978 = vst.msk [vmem:[%s3 + $0x24] sm:$0xf] %vm968, %v849
  %979 = vst.msk [vmem:[%s3 + $0x28] sm:$0xf] %vm968, %v850
  %980 = vst.msk [vmem:[%s3 + $0x2c] sm:$0xf] %vm968, %v851
  %981 = vst.msk [vmem:[%s3 + $0x30] sm:$0xf] %vm968, %v852
  %982 = vst.msk [vmem:[%s3 + $0x34] sm:$0xf] %vm968, %v853
  %983 = vst.msk [vmem:[%s3 + $0x38] sm:$0xf] %vm968, %v854
  %984 = vst.msk [vmem:[%s3 + $0x3c] sm:$0xf] %vm968, %v855
  %985 = vst.msk [vmem:[%s3 + $0x40] sm:$0xf] %vm968, %v856
  %986 = vst.msk [vmem:[%s3 + $0x44] sm:$0xf] %vm968, %v857
  %987 = vst.msk [vmem:[%s3 + $0x48] sm:$0xf] %vm968, %v858
  %988 = vst.msk [vmem:[%s3 + $0x4c] sm:$0xf] %vm968, %v859
  %989 = vst.msk [vmem:[%s3 + $0x50] sm:$0xf] %vm968, %v860
  %990 = vst.msk [vmem:[%s3 + $0x54] sm:$0xf] %vm968, %v861
  %991 = vst.msk [vmem:[%s3 + $0x58] sm:$0xf] %vm968, %v862
  %992 = vst.msk [vmem:[%s3 + $0x5c] sm:$0xf] %vm968, %v863
  %993 = vst.msk [vmem:[%s3 + $0x60] sm:$0xf] %vm968, %v864
  %994 = vst.msk [vmem:[%s3 + $0x64] sm:$0xf] %vm968, %v865
  %995 = vst.msk [vmem:[%s3 + $0x68] sm:$0xf] %vm968, %v866
  %996 = vst.msk [vmem:[%s3 + $0x6c] sm:$0xf] %vm968, %v867
  %997 = vst.msk [vmem:[%s3 + $0x70] sm:$0xf] %vm968, %v868
  %998 = vst.msk [vmem:[%s3 + $0x74] sm:$0xf] %vm968, %v869
  %999 = vst.msk [vmem:[%s3 + $0x78] sm:$0xf] %vm968, %v870
  %1000 = vst.msk [vmem:[%s3 + $0x7c] sm:$0xf] %vm968, %v871
  %1001 = vst.msk [vmem:[%s3 + $0x80] sm:$0xf] %vm968, %v872
  %1002 = vst.msk [vmem:[%s3 + $0x84] sm:$0xf] %vm968, %v873
  %1003 = vst.msk [vmem:[%s3 + $0x88] sm:$0xf] %vm968, %v874
  %1004 = vst.msk [vmem:[%s3 + $0x8c] sm:$0xf] %vm968, %v875
  %1005 = vst.msk [vmem:[%s3 + $0x90] sm:$0xf] %vm968, %v876
  %1006 = vst.msk [vmem:[%s3 + $0x94] sm:$0xf] %vm968, %v877
  %1007 = vst.msk [vmem:[%s3 + $0x98] sm:$0xf] %vm968, %v878
  %1008 = vst.msk [vmem:[%s3 + $0x9c] sm:$0xf] %vm968, %v879
  %1009 = vst.msk [vmem:[%s3 + $0xa0] sm:$0xf] %vm968, %v880
  %1010 = vst.msk [vmem:[%s3 + $0xa4] sm:$0xf] %vm968, %v881
  %1011 = vst.msk [vmem:[%s3 + $0xa8] sm:$0xf] %vm968, %v882
  %1012 = vst.msk [vmem:[%s3 + $0xac] sm:$0xf] %vm968, %v883
  %1013 = vst.msk [vmem:[%s3 + $0xb0] sm:$0xf] %vm968, %v884
  %1014 = vst.msk [vmem:[%s3 + $0xb4] sm:$0xf] %vm968, %v885
  %1015 = vst.msk [vmem:[%s3 + $0xb8] sm:$0xf] %vm968, %v886
  %1016 = vst.msk [vmem:[%s3 + $0xbc] sm:$0xf] %vm968, %v887
  %1017 = vst.msk [vmem:[%s3 + $0xc0] sm:$0xf] %vm968, %v888
  %1018 = vst.msk [vmem:[%s3 + $0xc4] sm:$0xf] %vm968, %v889
  %1019 = vst.msk [vmem:[%s3 + $0xc8] sm:$0xf] %vm968, %v890
  %1020 = vst.msk [vmem:[%s3 + $0xcc] sm:$0xf] %vm968, %v891
  %1021 = vst.msk [vmem:[%s3 + $0xd0] sm:$0xf] %vm968, %v892
  %1022 = vst.msk [vmem:[%s3 + $0xd4] sm:$0xf] %vm968, %v893
  %1023 = vst.msk [vmem:[%s3 + $0xd8] sm:$0xf] %vm968, %v894
  %1024 = vst.msk [vmem:[%s3 + $0xdc] sm:$0xf] %vm968, %v895
  %1025 = vst.msk [vmem:[%s3 + $0xe0] sm:$0xf] %vm968, %v896
  %1026 = vst.msk [vmem:[%s3 + $0xe4] sm:$0xf] %vm968, %v897
  %1027 = vst.msk [vmem:[%s3 + $0xe8] sm:$0xf] %vm968, %v898
  %1028 = vst.msk [vmem:[%s3 + $0xec] sm:$0xf] %vm968, %v899
  %1029 = vst.msk [vmem:[%s3 + $0xf0] sm:$0xf] %vm968, %v900
  %1030 = vst.msk [vmem:[%s3 + $0xf4] sm:$0xf] %vm968, %v901
  %1031 = vst.msk [vmem:[%s3 + $0xf8] sm:$0xf] %vm968, %v902
  %1032 = vst.msk [vmem:[%s3 + $0xfc] sm:$0xf] %vm968, %v903
  // Predicated region
  $region14: #{tpu_custom_call.1} parent=0 // pred_check
    _
  $region15: #{tpu_custom_call.1} parent=0 // pred_check_branch
    %1034 = sbr.rel (0) target = $region17
  $region16: #{tpu_custom_call.1} parent=0 // pred_region
    _
  $region17: #{tpu_custom_call.1} parent=0 // pred_fallthru
    _
  // Predicated region
  $region18: #{tpu_custom_call.1} parent=0 // pred_check
    _
  $region19: #{tpu_custom_call.1} parent=0 // pred_check_branch
    %1036 = sbr.rel (0) target = $region21
  $region20: #{tpu_custom_call.1} parent=0 // pred_region
    _
  $region21: #{tpu_custom_call.1} parent=0 // pred_fallthru
    _

</llo_original>
